<compile_context>
chip_gen: v6e
topology: v6e:2x2x1
jax: 0.10.0
libtpu: 0.0.40
codegen_flags: <defaults>
</compile_context>

<pallas_src>
import jax
import jax.numpy as jnp
from jax.experimental import pallas as pl
from jax.experimental.pallas import tpu as pltpu


TB_MAX = 4096  # batch tile (rows per grid step)


def _round_up(n, m):
    return ((n + m - 1) // m) * m


def mlp_kernel(x_ref, w1_ref, b1_ref, w2_ref, b2_ref,
               w3_ref, b3_ref, w4_ref, b4_ref,
               comb_ref):
    # f32 -> bf16 cast in-kernel (hides under the activation DMA).
    x = x_ref[...].astype(jnp.bfloat16)                                    # (TB, 88)

    h1 = jnp.dot(x, w1_ref[...], preferred_element_type=jnp.float32) + b1_ref[...]
    h1 = jnp.maximum(h1, 0.0).astype(jnp.bfloat16)                         # (TB, 128)

    h2 = jnp.dot(h1, w2_ref[...], preferred_element_type=jnp.float32) + b2_ref[...]
    h2 = jnp.maximum(h2, 0.0).astype(jnp.bfloat16)                         # (TB, 128)

    latent = jnp.dot(h2, w3_ref[...],
                     preferred_element_type=jnp.float32) + b3_ref[...]     # (TB, 64) f32

    # Head is lane-padded to 64 outputs (cols 3:64 of w4/b4 are zero) so the
    # combined slab below is a dense 128-lane store.
    out64 = jnp.dot(latent.astype(jnp.bfloat16), w4_ref[...],
                    preferred_element_type=jnp.float32) + b4_ref[...]      # (TB, 64) f32

    # Combined output slab: [:, :64] = latent, [:, 64:67] = out, rest zero.
    comb_ref[...] = jnp.concatenate([latent, out64], axis=-1).astype(comb_ref.dtype)


def mlp_forward(x, params):
    """x: (B, 88) float32. params: dict of (in,out) f32 weights and (1,out) f32 biases.

    Returns (out (B,3) f32, latent (B,64) f32).
    """
    B, D_in = x.shape
    assert D_in == 88
    x = x.astype(jnp.float32)   # no-op for f32 inputs; kernel casts to bf16 itself

    # One-time dtype prep (weights bf16 for MXU peak + halved DMA; biases f32
    # so bias-add/ReLU run in f32 on the VPU).
    w1 = params["w1"].astype(jnp.bfloat16)
    w2 = params["w2"].astype(jnp.bfloat16)
    w3 = params["w3"].astype(jnp.bfloat16)
    b1 = params["b1"].astype(jnp.float32)
    b2 = params["b2"].astype(jnp.float32)
    b3 = params["b3"].astype(jnp.float32)
    # Lane-pad the 3-wide head to 64 output lanes (zero columns).
    w4p = jnp.zeros((64, 64), jnp.bfloat16).at[:, :3].set(
        params["w4"].astype(jnp.bfloat16))
    b4p = jnp.zeros((1, 64), jnp.float32).at[:, :3].set(
        params["b4"].astype(jnp.float32))

    # Batch tiling:
    #  - >= 2 grid steps when B > 16 so "parallel" shards across v7x's 2 TCs,
    #  - TB multiple of 16 (bf16 sublane packing), capped at TB_MAX,
    #  - ragged last block handled by Pallas read/write masking (no jnp.pad).
    if B <= 16:
        TB = _round_up(B, 8)
    else:
        nsteps = max(2, pl.cdiv(B, TB_MAX))
        TB = min(TB_MAX, _round_up(pl.cdiv(B, nsteps), 16))
    grid = (pl.cdiv(B, TB),)

    act_spec_x = pl.BlockSpec((TB, 88), lambda i: (i, 0))
    weight_spec = lambda shape: pl.BlockSpec(shape, lambda i: (0, 0))  # resident across steps

    flops = 2 * B * (88 * 128 + 128 * 128 + 128 * 64 + 64 * 64)
    bytes_accessed = (
        B * 88 * 4                                           # x (f32)
        + B * 128 * 4                                        # combined latent/out slab (f32)
        + (88 * 128 + 128 * 128 + 128 * 64 + 64 * 64) * 2    # weights (bf16)
        + (128 + 128 + 64 + 64) * 4                          # biases (f32)
    )

    comb = pl.pallas_call(
        mlp_kernel,
        grid=grid,
        out_shape=jax.ShapeDtypeStruct((B, 128), jnp.float32),
        in_specs=[
            act_spec_x,                # x (f32)
            weight_spec((88, 128)),    # w1
            weight_spec((1, 128)),     # b1
            weight_spec((128, 128)),   # w2
            weight_spec((1, 128)),     # b2
            weight_spec((128, 64)),    # w3
            weight_spec((1, 64)),      # b3
            weight_spec((64, 64)),     # w4 (lane-padded head)
            weight_spec((1, 64)),      # b4 (lane-padded head)
        ],
        out_specs=pl.BlockSpec((TB, 128), lambda i: (i, 0)),
        compiler_params=pltpu.CompilerParams(
            dimension_semantics=("parallel",),
            vmem_limit_bytes=32 * 1024 * 1024,
        ),
        cost_estimate=pl.CostEstimate(
            flops=flops, transcendentals=0, bytes_accessed=bytes_accessed),
    )(x, w1, b1, w2, b2, w3, b3, w4p, b4p)

    # TODO(synk): all matmul inputs (incl. latent->head) are bf16; results match
    # an f32 PyTorch MLP to ~1e-2 rel. Use f32 for w3/w4 if exact parity needed.
    latent = comb[:, :64]
    out = comb[:, 64:67]
    return out, latent


def init_params(key):
    """Deterministic init mirroring PyTorch nn.Linear default
    (U[-1/sqrt(fan_in), +1/sqrt(fan_in)]). Weights stored as (in, out)."""
    dims = [(88, 128), (128, 128), (128, 64), (64, 3)]
    params = {}
    keys = jax.random.split(key, 2 * len(dims))
    for i, (fan_in, fan_out) in enumerate(dims):
        bound = 1.0 / jnp.sqrt(jnp.float32(fan_in))
        w = jax.random.uniform(keys[2 * i], (fan_in, fan_out),
                               minval=-bound, maxval=bound, dtype=jnp.float32)
        b = jax.random.uniform(keys[2 * i + 1], (1, fan_out),
                               minval=-bound, maxval=bound, dtype=jnp.float32)
        params[f"w{i + 1}"] = w
        params[f"b{i + 1}"] = b
    return params


def mlp_reference(x, p):
    """Pure-JAX reference mimicking the kernel's bf16-input / f32-accumulate math."""
    def bf(a):
        return a.astype(jnp.bfloat16).astype(jnp.float32)

    h1 = jnp.maximum(bf(x) @ bf(p["w1"]) + p["b1"], 0.0)
    h2 = jnp.maximum(bf(h1) @ bf(p["w2"]) + p["b2"], 0.0)
    latent = bf(h2) @ bf(p["w3"]) + p["b3"]
    out = bf(latent) @ bf(p["w4"]) + p["b4"]
    return out, latent


if __name__ == "__main__":
    key = jax.random.PRNGKey(0)
    k_x, k_p = jax.random.split(key)

    batch = 8
    x = jax.random.normal(k_x, (batch, 88), dtype=jnp.float32)
    params = init_params(k_p)

    out, latent = jax.block_until_ready(mlp_forward(x, params))

    ref_out, ref_latent = mlp_reference(x, params)
    assert out.shape == (batch, 3) and latent.shape == (batch, 64)
    assert jnp.allclose(out, ref_out, atol=2e-2, rtol=2e-2), (
        float(jnp.max(jnp.abs(out - ref_out))))
    assert jnp.allclose(latent, ref_latent, atol=2e-2, rtol=2e-2), (
        float(jnp.max(jnp.abs(latent - ref_latent))))

    print("KERNEL_OK")
</pallas_src>

<mosaic_0001>
module attributes {stable_mosaic.version = 11 : i64} {
  func.func @mlp_kernel(%arg0: i32, %arg1: memref<8x88xf32, #tpu.memory_space<vmem>>, %arg2: memref<88x128xbf16, #tpu.memory_space<vmem>>, %arg3: memref<1x128xf32, #tpu.memory_space<vmem>>, %arg4: memref<128x128xbf16, #tpu.memory_space<vmem>>, %arg5: memref<1x128xf32, #tpu.memory_space<vmem>>, %arg6: memref<128x64xbf16, #tpu.memory_space<vmem>>, %arg7: memref<1x64xf32, #tpu.memory_space<vmem>>, %arg8: memref<64x64xbf16, #tpu.memory_space<vmem>>, %arg9: memref<1x64xf32, #tpu.memory_space<vmem>>, %arg10: memref<8x128xf32, #tpu.memory_space<vmem>>) attributes {dimension_semantics = [#tpu.dimension_semantics<parallel>], iteration_bounds = array<i64: 1>, scalar_prefetch = 0 : i64, scratch_operands = 0 : i64, tpu.core_type = #tpu.core_type<tc>, window_params = [{transform_indices = @transform_0, window_bounds = array<i64: 8, 88>}, {pipeline_mode = #tpu.pipeline_mode<synchronous>, transform_indices = @transform_1, window_bounds = array<i64: 88, 128>}, {pipeline_mode = #tpu.pipeline_mode<synchronous>, transform_indices = @transform_2, window_bounds = array<i64: 1, 128>}, {pipeline_mode = #tpu.pipeline_mode<synchronous>, transform_indices = @transform_3, window_bounds = array<i64: 128, 128>}, {pipeline_mode = #tpu.pipeline_mode<synchronous>, transform_indices = @transform_4, window_bounds = array<i64: 1, 128>}, {pipeline_mode = #tpu.pipeline_mode<synchronous>, transform_indices = @transform_5, window_bounds = array<i64: 128, 64>}, {pipeline_mode = #tpu.pipeline_mode<synchronous>, transform_indices = @transform_6, window_bounds = array<i64: 1, 64>}, {pipeline_mode = #tpu.pipeline_mode<synchronous>, transform_indices = @transform_7, window_bounds = array<i64: 64, 64>}, {pipeline_mode = #tpu.pipeline_mode<synchronous>, transform_indices = @transform_8, window_bounds = array<i64: 1, 64>}, {transform_indices = @transform_9, window_bounds = array<i64: 8, 128>}]} {
    %c0 = arith.constant 0 : index
    %c0_0 = arith.constant 0 : index
    %0 = vector.load %arg1[%c0, %c0_0] : memref<8x88xf32, #tpu.memory_space<vmem>>, vector<8x88xf32>
    %1 = arith.truncf %0 : vector<8x88xf32> to vector<8x88xbf16>
    %c0_1 = arith.constant 0 : index
    %c0_2 = arith.constant 0 : index
    %2 = vector.load %arg2[%c0_1, %c0_2] : memref<88x128xbf16, #tpu.memory_space<vmem>>, vector<88x128xbf16>
    %cst = arith.constant dense<0.000000e+00> : vector<8x128xf32>
    %3 = tpu.matmul %1, %2, %cst {dimension_numbers = #tpu.dot_dimension_numbers<[1], [0], [0], [1], [0, 0, 1, 1], [], []>} : vector<8x88xbf16>, vector<88x128xbf16>, vector<8x128xf32> -> vector<8x128xf32>
    %c0_3 = arith.constant 0 : index
    %c0_4 = arith.constant 0 : index
    %4 = vector.load %arg3[%c0_3, %c0_4] : memref<1x128xf32, #tpu.memory_space<vmem>>, vector<1x128xf32>
    %5 = vector.broadcast %4 : vector<1x128xf32> to vector<8x128xf32>
    %6 = arith.addf %3, %5 : vector<8x128xf32>
    %cst_5 = arith.constant 0.000000e+00 : f32
    %7 = vector.broadcast %cst_5 : f32 to vector<8x128xf32>
    %8 = arith.maximumf %6, %7 : vector<8x128xf32>
    %9 = arith.truncf %8 : vector<8x128xf32> to vector<8x128xbf16>
    %c0_6 = arith.constant 0 : index
    %c0_7 = arith.constant 0 : index
    %10 = vector.load %arg4[%c0_6, %c0_7] : memref<128x128xbf16, #tpu.memory_space<vmem>>, vector<128x128xbf16>
    %cst_8 = arith.constant dense<0.000000e+00> : vector<8x128xf32>
    %11 = tpu.matmul %9, %10, %cst_8 {dimension_numbers = #tpu.dot_dimension_numbers<[1], [0], [0], [1], [0, 0, 1, 1], [], []>} : vector<8x128xbf16>, vector<128x128xbf16>, vector<8x128xf32> -> vector<8x128xf32>
    %c0_9 = arith.constant 0 : index
    %c0_10 = arith.constant 0 : index
    %12 = vector.load %arg5[%c0_9, %c0_10] : memref<1x128xf32, #tpu.memory_space<vmem>>, vector<1x128xf32>
    %13 = vector.broadcast %12 : vector<1x128xf32> to vector<8x128xf32>
    %14 = arith.addf %11, %13 : vector<8x128xf32>
    %cst_11 = arith.constant 0.000000e+00 : f32
    %15 = vector.broadcast %cst_11 : f32 to vector<8x128xf32>
    %16 = arith.maximumf %14, %15 : vector<8x128xf32>
    %17 = arith.truncf %16 : vector<8x128xf32> to vector<8x128xbf16>
    %c0_12 = arith.constant 0 : index
    %c0_13 = arith.constant 0 : index
    %18 = vector.load %arg6[%c0_12, %c0_13] : memref<128x64xbf16, #tpu.memory_space<vmem>>, vector<128x64xbf16>
    %cst_14 = arith.constant dense<0.000000e+00> : vector<8x64xf32>
    %19 = tpu.matmul %17, %18, %cst_14 {dimension_numbers = #tpu.dot_dimension_numbers<[1], [0], [0], [1], [0, 0, 1, 1], [], []>} : vector<8x128xbf16>, vector<128x64xbf16>, vector<8x64xf32> -> vector<8x64xf32>
    %c0_15 = arith.constant 0 : index
    %c0_16 = arith.constant 0 : index
    %20 = vector.load %arg7[%c0_15, %c0_16] : memref<1x64xf32, #tpu.memory_space<vmem>>, vector<1x64xf32>
    %21 = vector.broadcast %20 : vector<1x64xf32> to vector<8x64xf32>
    %22 = arith.addf %19, %21 : vector<8x64xf32>
    %23 = arith.truncf %22 : vector<8x64xf32> to vector<8x64xbf16>
    %c0_17 = arith.constant 0 : index
    %c0_18 = arith.constant 0 : index
    %24 = vector.load %arg8[%c0_17, %c0_18] : memref<64x64xbf16, #tpu.memory_space<vmem>>, vector<64x64xbf16>
    %cst_19 = arith.constant dense<0.000000e+00> : vector<8x64xf32>
    %25 = tpu.matmul %23, %24, %cst_19 {dimension_numbers = #tpu.dot_dimension_numbers<[1], [0], [0], [1], [0, 0, 1, 1], [], []>} : vector<8x64xbf16>, vector<64x64xbf16>, vector<8x64xf32> -> vector<8x64xf32>
    %c0_20 = arith.constant 0 : index
    %c0_21 = arith.constant 0 : index
    %26 = vector.load %arg9[%c0_20, %c0_21] : memref<1x64xf32, #tpu.memory_space<vmem>>, vector<1x64xf32>
    %27 = vector.broadcast %26 : vector<1x64xf32> to vector<8x64xf32>
    %28 = arith.addf %25, %27 : vector<8x64xf32>
    %29 = tpu.concatenate %22, %28 in 1 : vector<8x64xf32>, vector<8x64xf32> -> vector<8x128xf32>
    %c0_22 = arith.constant 0 : index
    %c0_23 = arith.constant 0 : index
    %30 = vector.load %arg10[%c0_22, %c0_23] : memref<8x128xf32, #tpu.memory_space<vmem>>, vector<8x128xf32>
    tpu.vector_store %arg10[%c0_22, %c0_23], %29 {strides = array<i32>} : memref<8x128xf32, #tpu.memory_space<vmem>>, vector<8x128xf32>,
    return
  }
  func.func @transform_0(%arg0: i32) -> (i32, i32) {
    %c0_i32 = arith.constant 0 : i32
    %c0_i32_0 = arith.constant 0 : i32
    return %arg0, %c0_i32 : i32, i32
  }
  func.func @transform_1(%arg0: i32) -> (i32, i32) {
    %c0_i32 = arith.constant 0 : i32
    %c0_i32_0 = arith.constant 0 : i32
    %c0_i32_1 = arith.constant 0 : i32
    return %c0_i32, %c0_i32_0 : i32, i32
  }
  func.func @transform_2(%arg0: i32) -> (i32, i32) {
    %c0_i32 = arith.constant 0 : i32
    %c0_i32_0 = arith.constant 0 : i32
    %c0_i32_1 = arith.constant 0 : i32
    return %c0_i32, %c0_i32_0 : i32, i32
  }
  func.func @transform_3(%arg0: i32) -> (i32, i32) {
    %c0_i32 = arith.constant 0 : i32
    %c0_i32_0 = arith.constant 0 : i32
    %c0_i32_1 = arith.constant 0 : i32
    return %c0_i32, %c0_i32_0 : i32, i32
  }
  func.func @transform_4(%arg0: i32) -> (i32, i32) {
    %c0_i32 = arith.constant 0 : i32
    %c0_i32_0 = arith.constant 0 : i32
    %c0_i32_1 = arith.constant 0 : i32
    return %c0_i32, %c0_i32_0 : i32, i32
  }
  func.func @transform_5(%arg0: i32) -> (i32, i32) {
    %c0_i32 = arith.constant 0 : i32
    %c0_i32_0 = arith.constant 0 : i32
    %c0_i32_1 = arith.constant 0 : i32
    return %c0_i32, %c0_i32_0 : i32, i32
  }
  func.func @transform_6(%arg0: i32) -> (i32, i32) {
    %c0_i32 = arith.constant 0 : i32
    %c0_i32_0 = arith.constant 0 : i32
    %c0_i32_1 = arith.constant 0 : i32
    return %c0_i32, %c0_i32_0 : i32, i32
  }
  func.func @transform_7(%arg0: i32) -> (i32, i32) {
    %c0_i32 = arith.constant 0 : i32
    %c0_i32_0 = arith.constant 0 : i32
    %c0_i32_1 = arith.constant 0 : i32
    return %c0_i32, %c0_i32_0 : i32, i32
  }
  func.func @transform_8(%arg0: i32) -> (i32, i32) {
    %c0_i32 = arith.constant 0 : i32
    %c0_i32_0 = arith.constant 0 : i32
    %c0_i32_1 = arith.constant 0 : i32
    return %c0_i32, %c0_i32_0 : i32, i32
  }
  func.func @transform_9(%arg0: i32) -> (i32, i32) {
    %c0_i32 = arith.constant 0 : i32
    %c0_i32_0 = arith.constant 0 : i32
    return %arg0, %c0_i32 : i32, i32
  }
}

</mosaic_0001>

<llo_original>
// kernel: tpu_custom_call.1
$region0: #{tpu_custom_call.1}
  #allocation0 [shape = 'u32[]', space=smem, size = 0x4, offset = 0x4, fixed_abs, tag = 'smem constant byte address 0x4 - core index']
  #allocation1 [shape = 'u32[144,128]{1,0:T(1,128)}', space=vmem, size = 0x12000, scoped, tag = 'internal scratch']
  %s0 = inlined_call_operand.hbm [shape: f32[8,88], index: 0, kind: input, shape index: {}]
  %s1 = inlined_call_operand.hbm [shape: bf16[88,128], index: 1, kind: input, shape index: {}]
  %s2 = inlined_call_operand.vmem [shape: f32[1,128], index: 2, kind: input, shape index: {}]
  %s3 = inlined_call_operand.vmem [shape: bf16[128,128], index: 3, kind: input, shape index: {}]
  %s4 = inlined_call_operand.vmem [shape: f32[1,128], index: 4, kind: input, shape index: {}]
  %s5 = inlined_call_operand.vmem [shape: bf16[128,64], index: 5, kind: input, shape index: {}]
  %s6 = inlined_call_operand.vmem [shape: f32[1,64], index: 6, kind: input, shape index: {}]
  %s7 = inlined_call_operand.vmem [shape: bf16[64,64], index: 7, kind: input, shape index: {}]
  %s8 = inlined_call_operand.vmem [shape: f32[1,64], index: 8, kind: input, shape index: {}]
  %s9 = inlined_call_operand.hbm [shape: f32[8,128], index: 9, kind: output, shape index: {}]
  %s10 = sld [smem:[#allocation0]]
  $region54: #{tpu_custom_call.1} parent=0
    _
  %s12 = ssub.s32 1, %s10
  %s13 = scalar_select 0, %s12, %s10
  $region1: #{tpu_custom_call.1} parent=0
    #allocation2 [shape = 'u8[4096]{0}', space=vmem, size = 0x1000, scoped, tag = 'input window, operand 0, single buffered']
    #allocation3 [shape = 's32[1]{0}', space=sflag, size = 0x4, scoped, tag = 'scoped memory for tpu_custom_call.1']
    #allocation4 [shape = 's32[1]{0}', space=sflag, size = 0x4, scoped, tag = 'scoped memory for tpu_custom_call.1']
    #allocation5 [shape = 'u8[22528]{0}', space=vmem, size = 0x5800, scoped, tag = 'input window, operand 1, single buffered']
    #allocation6 [shape = 's32[1]{0}', space=sflag, size = 0x4, scoped, tag = 'scoped memory for tpu_custom_call.1']
    #allocation7 [shape = 'u8[4096]{0}', space=vmem, size = 0x1000, scoped, tag = 'output window, operand 0, single buffered']
    %14 = vsyncpa [#allocation3], 0
    %15 = vsyncpa [#allocation6], 0
    %16 = vsyncpa [#allocation4], 0
    // Predicated region
    $region2: #{tpu_custom_call.1} parent=1 // pred_check
      _
    $region3: #{tpu_custom_call.1} parent=1 // pred_check_branch
      %18 = sbr.rel (0) target = $region5
    $region4: #{tpu_custom_call.1} parent=1 // pred_region
      %s20 = ssub.s32 128, 128
      %21 = vsyncadd [#allocation3], %s20
      %s23 = sshll.u32 [#allocation2], 4
      %s24 = int_to_ptr.vmem [resolvable:$true] %s23
      %26 = dma.hbm_to_vmem [thread:$0]  %s0, 128, %s24, [#allocation3]
    $region5: #{tpu_custom_call.1} parent=1 // pred_fallthru
      _
    // Predicated region
    $region6: #{tpu_custom_call.1} parent=1 // pred_check
      _
    $region7: #{tpu_custom_call.1} parent=1 // pred_check_branch
      %28 = sbr.rel (0) target = $region9
    $region8: #{tpu_custom_call.1} parent=1 // pred_region
      %s30 = ssub.s32 704, 704
      %31 = vsyncadd [#allocation6], %s30
      %s32 = sshll.u32 [#allocation5], 4
      %s33 = int_to_ptr.vmem [resolvable:$true] %s32
      %38 = dma.hbm_to_vmem [thread:$0]  %s1, 704, %s33, [#allocation6], 64, 64, 4
    $region9: #{tpu_custom_call.1} parent=1 // pred_fallthru
      _
    // Predicated region
    $region10: #{tpu_custom_call.1} parent=1 // pred_check
      _
    $region11: #{tpu_custom_call.1} parent=1 // pred_check_branch
      %40 = sbr.rel (0) target = $region13
    $region12: #{tpu_custom_call.1} parent=1 // pred_region
      _
    $region13: #{tpu_custom_call.1} parent=1 // pred_fallthru
      _
    // Predicated region
    $region14: #{tpu_custom_call.1} parent=1 // pred_check
      _
    $region15: #{tpu_custom_call.1} parent=1 // pred_check_branch
      %42 = sbr.rel (0) target = $region17
    $region16: #{tpu_custom_call.1} parent=1 // pred_region
      _
    $region17: #{tpu_custom_call.1} parent=1 // pred_fallthru
      _
    // Predicated region
    $region18: #{tpu_custom_call.1} parent=1 // pred_check
      _
    $region19: #{tpu_custom_call.1} parent=1 // pred_check_branch
      %44 = sbr.rel (0) target = $region21
    $region20: #{tpu_custom_call.1} parent=1 // pred_region
      _
    $region21: #{tpu_custom_call.1} parent=1 // pred_fallthru
      _
    // Predicated region
    $region22: #{tpu_custom_call.1} parent=1 // pred_check
      _
    $region23: #{tpu_custom_call.1} parent=1 // pred_check_branch
      %46 = sbr.rel (0) target = $region25
    $region24: #{tpu_custom_call.1} parent=1 // pred_region
      _
    $region25: #{tpu_custom_call.1} parent=1 // pred_fallthru
      _
    // Predicated region
    $region26: #{tpu_custom_call.1} parent=1 // pred_check
      _
    $region27: #{tpu_custom_call.1} parent=1 // pred_check_branch
      %48 = sbr.rel (0) target = $region29
    $region28: #{tpu_custom_call.1} parent=1 // pred_region
      _
    $region29: #{tpu_custom_call.1} parent=1 // pred_fallthru
      _
    // Predicated region
    $region30: #{tpu_custom_call.1} parent=1 // pred_check
      _
    $region31: #{tpu_custom_call.1} parent=1 // pred_check_branch
      %50 = sbr.rel (0) target = $region33
    $region32: #{tpu_custom_call.1} parent=1 // pred_region
      _
    $region33: #{tpu_custom_call.1} parent=1 // pred_fallthru
      _
    // Predicated region
    $region34: #{tpu_custom_call.1} parent=1 // pred_check
      _
    $region35: #{tpu_custom_call.1} parent=1 // pred_check_branch
      %52 = sbr.rel (0) target = $region37
    $region36: #{tpu_custom_call.1} parent=1 // pred_region
      _
    $region37: #{tpu_custom_call.1} parent=1 // pred_fallthru
      _
    // Predicated region
    $region38: #{tpu_custom_call.1} parent=1 // pred_check
      _
    $region39: #{tpu_custom_call.1} parent=1 // pred_check_branch
      %54 = sbr.rel (0) target = $region41
    $region40: #{tpu_custom_call.1} parent=1 // pred_region
      %55 = dma.done [#allocation3], 128
    $region41: #{tpu_custom_call.1} parent=1 // pred_fallthru
      _
    // Predicated region
    $region42: #{tpu_custom_call.1} parent=1 // pred_check
      _
    $region43: #{tpu_custom_call.1} parent=1 // pred_check_branch
      %57 = sbr.rel (0) target = $region45
    $region44: #{tpu_custom_call.1} parent=1 // pred_region
      %58 = dma.done [#allocation6], 704
    $region45: #{tpu_custom_call.1} parent=1 // pred_fallthru
      _
    %v60 = vld [vmem:[#allocation2] sm:$0xff]
    %v61 = vpack.c.bf16 %v60, %v60
    %v62 = vld [vmem:[#allocation5] sm:$0xf]
    %v63 = vld [vmem:[#allocation5 + $0x4] sm:$0xf]
    %v64 = vld [vmem:[#allocation5 + $0x8] sm:$0xf]
    %v65 = vld [vmem:[#allocation5 + $0xc] sm:$0xf]
    %v66 = vld [vmem:[#allocation5 + $0x10] sm:$0xf]
    %v67 = vld [vmem:[#allocation5 + $0x14] sm:$0xf]
    %v68 = vld [vmem:[#allocation5 + $0x18] sm:$0xf]
    %v69 = vld [vmem:[#allocation5 + $0x1c] sm:$0xf]
    %v70 = vld [vmem:[#allocation5 + $0x20] sm:$0xf]
    %v71 = vld [vmem:[#allocation5 + $0x24] sm:$0xf]
    %v72 = vld [vmem:[#allocation5 + $0x28] sm:$0xf]
    %v73 = vld [vmem:[%s2] sm:$0x1]
    %v75 = vlaneseq
    %v76 = vshrl.u32 %v75, 7
    %v77 = vsub.s32 0, %v76
    %v78 = vrot.slane %v73, %v77
    %v91 = vunpack.c.l.b16 %v62
    %v92 = vunpack.c.l.b16 %v63
    %v93 = vunpack.c.l.b16 %v64
    %v94 = vunpack.c.l.b16 %v65
    %v95 = vunpack.c.l.b16 %v66
    %v96 = vunpack.c.l.b16 %v67
    %v97 = vunpack.c.l.b16 %v68
    %v98 = vunpack.c.l.b16 %v69
    %v99 = vunpack.c.l.b16 %v70
    %v100 = vunpack.c.l.b16 %v71
    %v101 = vunpack.c.l.b16 %v72
    %v102 = vpack.c.b16 %v92, %v91
    %v103 = vpack.c.b16 %v94, %v93
    %v104 = vpack.c.b16 %v96, %v95
    %v105 = vpack.c.b16 %v98, %v97
    %v106 = vpack.c.b16 %v100, %v99
    %v107 = vpack.c.b16 %v101, %v101
    %vm113 = vcmask 719872
    %v115 = vsel %vm113, %v61, 0
    %vm117 = vcmask 1043456
    %v119 = vsel %vm117, %v107, 0
    %121 = vmatprep.subr.bf16.mxu0 0
    %122 = vmatpush1.bf16.msra.mxu0 0
    %123 = vmatprep.subr.bf16.mxu0 0
    %124 = vmatpush1.bf16.msra.mxu0 0
    %125 = vmatprep.subr.bf16.mxu0 0
    %126 = vmatpush1.bf16.msra.mxu0 %v119
    %127 = vmatprep.subr.bf16.mxu0 0
    %128 = vmatpush1.bf16.msra.mxu0 %v106
    %129 = vmatprep.subr.bf16.mxu0 0
    %130 = vmatpush1.bf16.msra.mxu0 %v105
    %131 = vmatprep.subr.bf16.mxu0 0
    %132 = vmatpush1.bf16.msra.mxu0 %v104
    %133 = vmatprep.subr.bf16.mxu0 0
    %134 = vmatpush1.bf16.msra.mxu0 %v103
    %135 = vmatprep.subr.bf16.mxu0 0
    %136 = vmatpush1.bf16.msra.mxu0 %v102
    %137 = vmatprep.subr.bf16.mxu0 0
    %138 = vmatpush2.bf16.msra.mxu0 0
    %139 = vmatprep.subr.bf16.mxu0 0
    %140 = vmatpush2.bf16.msra.mxu0 0
    %141 = vmatprep.subr.bf16.mxu0 0
    %142 = vmatpush2.bf16.msra.mxu0 0
    %143 = vmatprep.subr.bf16.mxu0 0
    %144 = vmatpush2.bf16.msra.mxu0 0
    %145 = vmatprep.subr.bf16.mxu0 0
    %146 = vmatpush2.bf16.msra.mxu0 0
    %147 = vmatprep.subr.bf16.mxu0 0
    %148 = vmatpush2.bf16.msra.mxu0 0
    %149 = vmatprep.subr.bf16.mxu0 0
    %150 = vmatpush2.bf16.msra.mxu0 0
    %151 = vmatprep.subr.bf16.mxu0 0
    %152 = vmatpush2.bf16.msra.mxu0 0
    %153 = vmatprep.mubr.bf16.mxu0 0
    %154 = vmatmul.mubr.bf16.gmra.mxu0 %v115
    %v155 = vpop.f32.mrf.mxu0
    %v156 = vadd.f32 %v78, %v155
    %v157 = vpop.f32.mrf.mxu0
    %v158 = vpop.f32.mrf.mxu0
    %v159 = vpop.f32.mrf.mxu0
    %160 = vdwg.mxu0
    %v161 = vmax.f32 %v156, 0.0
    %v162 = vpack.c.bf16 %v161, %v161
    %v163 = vld [vmem:[%s3] sm:$0xf]
    %v164 = vld [vmem:[%s3 + $0x4] sm:$0xf]
    %v165 = vld [vmem:[%s3 + $0x8] sm:$0xf]
    %v166 = vld [vmem:[%s3 + $0xc] sm:$0xf]
    %v167 = vld [vmem:[%s3 + $0x10] sm:$0xf]
    %v168 = vld [vmem:[%s3 + $0x14] sm:$0xf]
    %v169 = vld [vmem:[%s3 + $0x18] sm:$0xf]
    %v170 = vld [vmem:[%s3 + $0x1c] sm:$0xf]
    %v171 = vld [vmem:[%s3 + $0x20] sm:$0xf]
    %v172 = vld [vmem:[%s3 + $0x24] sm:$0xf]
    %v173 = vld [vmem:[%s3 + $0x28] sm:$0xf]
    %v174 = vld [vmem:[%s3 + $0x2c] sm:$0xf]
    %v175 = vld [vmem:[%s3 + $0x30] sm:$0xf]
    %v176 = vld [vmem:[%s3 + $0x34] sm:$0xf]
    %v177 = vld [vmem:[%s3 + $0x38] sm:$0xf]
    %v178 = vld [vmem:[%s3 + $0x3c] sm:$0xf]
    %v179 = vld [vmem:[%s4] sm:$0x1]
    %v181 = vlaneseq
    %v182 = vshrl.u32 %v181, 7
    %v183 = vsub.s32 0, %v182
    %v184 = vrot.slane %v179, %v183
    %v202 = vunpack.c.l.b16 %v163
    %v203 = vunpack.c.l.b16 %v164
    %v204 = vunpack.c.l.b16 %v165
    %v205 = vunpack.c.l.b16 %v166
    %v206 = vunpack.c.l.b16 %v167
    %v207 = vunpack.c.l.b16 %v168
    %v208 = vunpack.c.l.b16 %v169
    %v209 = vunpack.c.l.b16 %v170
    %v210 = vunpack.c.l.b16 %v171
    %v211 = vunpack.c.l.b16 %v172
    %v212 = vunpack.c.l.b16 %v173
    %v213 = vunpack.c.l.b16 %v174
    %v214 = vunpack.c.l.b16 %v175
    %v215 = vunpack.c.l.b16 %v176
    %v216 = vunpack.c.l.b16 %v177
    %v217 = vunpack.c.l.b16 %v178
    %v218 = vpack.c.b16 %v203, %v202
    %v219 = vpack.c.b16 %v205, %v204
    %v220 = vpack.c.b16 %v207, %v206
    %v221 = vpack.c.b16 %v209, %v208
    %v222 = vpack.c.b16 %v211, %v210
    %v223 = vpack.c.b16 %v213, %v212
    %v224 = vpack.c.b16 %v215, %v214
    %v225 = vpack.c.b16 %v217, %v216
    %234 = vmatprep.subr.bf16.mxu0 0
    %235 = vmatpush1.bf16.msra.mxu0 %v225
    %236 = vmatprep.subr.bf16.mxu0 0
    %237 = vmatpush1.bf16.msra.mxu0 %v224
    %238 = vmatprep.subr.bf16.mxu0 0
    %239 = vmatpush1.bf16.msra.mxu0 %v223
    %240 = vmatprep.subr.bf16.mxu0 0
    %241 = vmatpush1.bf16.msra.mxu0 %v222
    %242 = vmatprep.subr.bf16.mxu0 0
    %243 = vmatpush1.bf16.msra.mxu0 %v221
    %244 = vmatprep.subr.bf16.mxu0 0
    %245 = vmatpush1.bf16.msra.mxu0 %v220
    %246 = vmatprep.subr.bf16.mxu0 0
    %247 = vmatpush1.bf16.msra.mxu0 %v219
    %248 = vmatprep.subr.bf16.mxu0 0
    %249 = vmatpush1.bf16.msra.mxu0 %v218
    %250 = vmatprep.subr.bf16.mxu0 0
    %251 = vmatpush2.bf16.msra.mxu0 0
    %252 = vmatprep.subr.bf16.mxu0 0
    %253 = vmatpush2.bf16.msra.mxu0 0
    %254 = vmatprep.subr.bf16.mxu0 0
    %255 = vmatpush2.bf16.msra.mxu0 0
    %256 = vmatprep.subr.bf16.mxu0 0
    %257 = vmatpush2.bf16.msra.mxu0 0
    %258 = vmatprep.subr.bf16.mxu0 0
    %259 = vmatpush2.bf16.msra.mxu0 0
    %260 = vmatprep.subr.bf16.mxu0 0
    %261 = vmatpush2.bf16.msra.mxu0 0
    %262 = vmatprep.subr.bf16.mxu0 0
    %263 = vmatpush2.bf16.msra.mxu0 0
    %264 = vmatprep.subr.bf16.mxu0 0
    %265 = vmatpush2.bf16.msra.mxu0 0
    %266 = vmatprep.mubr.bf16.mxu0 0
    %267 = vmatmul.mubr.bf16.gmra.mxu0 %v162
    %v268 = vpop.f32.mrf.mxu0
    %v269 = vadd.f32 %v184, %v268
    %v270 = vpop.f32.mrf.mxu0
    %v271 = vpop.f32.mrf.mxu0
    %v272 = vpop.f32.mrf.mxu0
    %273 = vdwg.mxu0
    %v274 = vmax.f32 %v269, 0.0
    %v275 = vpack.c.bf16 %v274, %v274
    %v276 = vld [vmem:[%s5] sm:$0xf]
    %v277 = vld [vmem:[%s5 + $0x4] sm:$0xf]
    %v278 = vld [vmem:[%s5 + $0x8] sm:$0xf]
    %v279 = vld [vmem:[%s5 + $0xc] sm:$0xf]
    %v280 = vld [vmem:[%s5 + $0x10] sm:$0xf]
    %v281 = vld [vmem:[%s5 + $0x14] sm:$0xf]
    %v282 = vld [vmem:[%s5 + $0x18] sm:$0xf]
    %v283 = vld [vmem:[%s5 + $0x1c] sm:$0xf]
    %v284 = vld [vmem:[%s5 + $0x20] sm:$0xf]
    %v285 = vld [vmem:[%s5 + $0x24] sm:$0xf]
    %v286 = vld [vmem:[%s5 + $0x28] sm:$0xf]
    %v287 = vld [vmem:[%s5 + $0x2c] sm:$0xf]
    %v288 = vld [vmem:[%s5 + $0x30] sm:$0xf]
    %v289 = vld [vmem:[%s5 + $0x34] sm:$0xf]
    %v290 = vld [vmem:[%s5 + $0x38] sm:$0xf]
    %v291 = vld [vmem:[%s5 + $0x3c] sm:$0xf]
    %v292 = vld [vmem:[%s6] sm:$0x1]
    %v294 = vlaneseq
    %v295 = vshrl.u32 %v294, 7
    %v296 = vsub.s32 0, %v295
    %v297 = vrot.slane %v292, %v296
    %v315 = vunpack.c.l.b16 %v276
    %v316 = vunpack.c.l.b16 %v277
    %v317 = vunpack.c.l.b16 %v278
    %v318 = vunpack.c.l.b16 %v279
    %v319 = vunpack.c.l.b16 %v280
    %v320 = vunpack.c.l.b16 %v281
    %v321 = vunpack.c.l.b16 %v282
    %v322 = vunpack.c.l.b16 %v283
    %v323 = vunpack.c.l.b16 %v284
    %v324 = vunpack.c.l.b16 %v285
    %v325 = vunpack.c.l.b16 %v286
    %v326 = vunpack.c.l.b16 %v287
    %v327 = vunpack.c.l.b16 %v288
    %v328 = vunpack.c.l.b16 %v289
    %v329 = vunpack.c.l.b16 %v290
    %v330 = vunpack.c.l.b16 %v291
    %v331 = vpack.c.b16 %v316, %v315
    %v332 = vpack.c.b16 %v318, %v317
    %v333 = vpack.c.b16 %v320, %v319
    %v334 = vpack.c.b16 %v322, %v321
    %v335 = vpack.c.b16 %v324, %v323
    %v336 = vpack.c.b16 %v326, %v325
    %v337 = vpack.c.b16 %v328, %v327
    %v338 = vpack.c.b16 %v330, %v329
    %347 = vmatprep.subr.bf16.mxu0 0
    %348 = vmatpush1.bf16.msra.mxu0 %v338
    %349 = vmatprep.subr.bf16.mxu0 0
    %350 = vmatpush1.bf16.msra.mxu0 %v337
    %351 = vmatprep.subr.bf16.mxu0 0
    %352 = vmatpush1.bf16.msra.mxu0 %v336
    %353 = vmatprep.subr.bf16.mxu0 0
    %354 = vmatpush1.bf16.msra.mxu0 %v335
    %355 = vmatprep.subr.bf16.mxu0 0
    %356 = vmatpush1.bf16.msra.mxu0 %v334
    %357 = vmatprep.subr.bf16.mxu0 0
    %358 = vmatpush1.bf16.msra.mxu0 %v333
    %359 = vmatprep.subr.bf16.mxu0 0
    %360 = vmatpush1.bf16.msra.mxu0 %v332
    %361 = vmatprep.subr.bf16.mxu0 0
    %362 = vmatpush1.bf16.msra.mxu0 %v331
    %363 = vmatprep.subr.bf16.mxu0 0
    %364 = vmatpush2.bf16.msra.mxu0 0
    %365 = vmatprep.subr.bf16.mxu0 0
    %366 = vmatpush2.bf16.msra.mxu0 0
    %367 = vmatprep.subr.bf16.mxu0 0
    %368 = vmatpush2.bf16.msra.mxu0 0
    %369 = vmatprep.subr.bf16.mxu0 0
    %370 = vmatpush2.bf16.msra.mxu0 0
    %371 = vmatprep.subr.bf16.mxu0 0
    %372 = vmatpush2.bf16.msra.mxu0 0
    %373 = vmatprep.subr.bf16.mxu0 0
    %374 = vmatpush2.bf16.msra.mxu0 0
    %375 = vmatprep.subr.bf16.mxu0 0
    %376 = vmatpush2.bf16.msra.mxu0 0
    %377 = vmatprep.subr.bf16.mxu0 0
    %378 = vmatpush2.bf16.msra.mxu0 0
    %379 = vmatprep.mubr.bf16.mxu0 0
    %380 = vmatmul.mubr.bf16.gmra.mxu0 %v275
    %v381 = vpop.f32.mrf.mxu0
    %v382 = vadd.f32 %v297, %v381
    %v383 = vpop.f32.mrf.mxu0
    %v384 = vpop.f32.mrf.mxu0
    %v385 = vpop.f32.mrf.mxu0
    %386 = vdwg.mxu0
    %v387 = vpack.c.bf16 %v382, %v382
    %v388 = vld [vmem:[%s7] sm:$0xf]
    %v389 = vld [vmem:[%s7 + $0x4] sm:$0xf]
    %v390 = vld [vmem:[%s7 + $0x8] sm:$0xf]
    %v391 = vld [vmem:[%s7 + $0xc] sm:$0xf]
    %v392 = vld [vmem:[%s7 + $0x10] sm:$0xf]
    %v393 = vld [vmem:[%s7 + $0x14] sm:$0xf]
    %v394 = vld [vmem:[%s7 + $0x18] sm:$0xf]
    %v395 = vld [vmem:[%s7 + $0x1c] sm:$0xf]
    %v396 = vld [vmem:[%s8] sm:$0x1]
    %v398 = vlaneseq
    %v399 = vshrl.u32 %v398, 7
    %v400 = vsub.s32 0, %v399
    %v401 = vrot.slane %v396, %v400
    %v411 = vunpack.c.l.b16 %v388
    %v412 = vunpack.c.l.b16 %v389
    %v413 = vunpack.c.l.b16 %v390
    %v414 = vunpack.c.l.b16 %v391
    %v415 = vunpack.c.l.b16 %v392
    %v416 = vunpack.c.l.b16 %v393
    %v417 = vunpack.c.l.b16 %v394
    %v418 = vunpack.c.l.b16 %v395
    %v419 = vpack.c.b16 %v412, %v411
    %v420 = vpack.c.b16 %v414, %v413
    %v421 = vpack.c.b16 %v416, %v415
    %v422 = vpack.c.b16 %v418, %v417
    %vm427 = vcmask 523264
    %v429 = vsel %vm427, %v387, 0
    %431 = vmatprep.subr.bf16.mxu0 0
    %432 = vmatpush1.bf16.msra.mxu0 0
    %433 = vmatprep.subr.bf16.mxu0 0
    %434 = vmatpush1.bf16.msra.mxu0 0
    %435 = vmatprep.subr.bf16.mxu0 0
    %436 = vmatpush1.bf16.msra.mxu0 0
    %437 = vmatprep.subr.bf16.mxu0 0
    %438 = vmatpush1.bf16.msra.mxu0 0
    %439 = vmatprep.subr.bf16.mxu0 0
    %440 = vmatpush1.bf16.msra.mxu0 %v422
    %441 = vmatprep.subr.bf16.mxu0 0
    %442 = vmatpush1.bf16.msra.mxu0 %v421
    %443 = vmatprep.subr.bf16.mxu0 0
    %444 = vmatpush1.bf16.msra.mxu0 %v420
    %445 = vmatprep.subr.bf16.mxu0 0
    %446 = vmatpush1.bf16.msra.mxu0 %v419
    %447 = vmatprep.subr.bf16.mxu0 0
    %448 = vmatpush2.bf16.msra.mxu0 0
    %449 = vmatprep.subr.bf16.mxu0 0
    %450 = vmatpush2.bf16.msra.mxu0 0
    %451 = vmatprep.subr.bf16.mxu0 0
    %452 = vmatpush2.bf16.msra.mxu0 0
    %453 = vmatprep.subr.bf16.mxu0 0
    %454 = vmatpush2.bf16.msra.mxu0 0
    %455 = vmatprep.subr.bf16.mxu0 0
    %456 = vmatpush2.bf16.msra.mxu0 0
    %457 = vmatprep.subr.bf16.mxu0 0
    %458 = vmatpush2.bf16.msra.mxu0 0
    %459 = vmatprep.subr.bf16.mxu0 0
    %460 = vmatpush2.bf16.msra.mxu0 0
    %461 = vmatprep.subr.bf16.mxu0 0
    %462 = vmatpush2.bf16.msra.mxu0 0
    %463 = vmatprep.mubr.bf16.mxu0 0
    %464 = vmatmul.mubr.bf16.gmra.mxu0 %v429
    %v465 = vpop.f32.mrf.mxu0
    %v466 = vadd.f32 %v401, %v465
    %v467 = vpop.f32.mrf.mxu0
    %v468 = vpop.f32.mrf.mxu0
    %v469 = vpop.f32.mrf.mxu0
    %470 = vdwg.mxu0
    %472 = vrot.lane.b32.xlu0 %v466, 64
    %v473 = vpop.permute.xlu0 %472
    %v475 = vsel %vm427, %v382, %v473
    %476 = vst [vmem:[#allocation7] sm:$0xff] %v475
    // Predicated region
    $region46: #{tpu_custom_call.1} parent=1 // pred_check
      _
    $region47: #{tpu_custom_call.1} parent=1 // pred_check_branch
      %478 = sbr.rel (0) target = $region49
    $region48: #{tpu_custom_call.1} parent=1 // pred_region
      %s480 = ssub.s32 128, 128
      %481 = vsyncadd [#allocation4], %s480
      %s483 = sshll.u32 [#allocation7], 4
      %s484 = int_to_ptr.vmem [resolvable:$true] %s483
      %486 = dma.vmem_to_hbm [thread:$0]  %s484, 128, %s9, [#allocation4]
    $region49: #{tpu_custom_call.1} parent=1 // pred_fallthru
      _
    // Predicated region
    $region50: #{tpu_custom_call.1} parent=1 // pred_check
      _
    $region51: #{tpu_custom_call.1} parent=1 // pred_check_branch
      %488 = sbr.rel (0) target = $region53
    $region52: #{tpu_custom_call.1} parent=1 // pred_region
      %489 = dma.done [#allocation4], 128
    $region53: #{tpu_custom_call.1} parent=1 // pred_fallthru
      _
    %490 = vsyncpa [#allocation3], 1
    %491 = vsyncpa [#allocation6], 1
    %492 = vsyncpa [#allocation4], 1

</llo_original>
